<compile_context>
chip_gen: v5e
topology: v5e:2x2
jax: 0.10.0
libtpu: 0.0.40
codegen_flags: <defaults>
</compile_context>

<pallas_src>
import functools

import jax
import jax.numpy as jnp
from jax.experimental import pallas as pl
from jax.experimental.pallas import tpu as pltpu


def _correlation_kernel(x1_ref, x2_ref, out_ref, acc_ref, *, D, TH, inv_c,
                        single_chunk):
    """One (batch, H-tile, channel-chunk) grid step.

    x1_ref : (CC, TH, W)     -- H-tile x channel-chunk of query features
    x2_ref : (CC, Hp, Wp)    -- channel-chunk of (padded) target features
    out_ref: (D*D, TH, W)    -- cost-volume tile, output channel k = i*D + j
    acc_ref: (D*D, TH, W)    -- f32 accumulator scratch (unused if single_chunk)
    """
    W = out_ref.shape[-1]
    halo = D - 1
    row0 = pl.multiple_of(pl.program_id(1) * TH, TH)

    if not single_chunk:
        @pl.when(pl.program_id(2) == 0)
        def _init():
            acc_ref[...] = jnp.zeros_like(acc_ref)

    # Cast once per chunk; every displacement window below reuses these
    # VMEM-resident f32 values instead of re-reading / re-casting the block.
    x1 = x1_ref[...].astype(jnp.float32)                               # (CC, TH, W)
    slab = x2_ref[:, pl.ds(row0, TH + halo), :].astype(jnp.float32)    # (CC, TH+D-1, Wp)

    for j in range(D):                        # lane-offset slice hoisted to outer loop
        slab_j = slab[:, :, j:j + W]          # (CC, TH+D-1, W)
        for i in range(D):                    # cheap sublane-offset window
            win = slab_j[:, i:i + TH, :]      # (CC, TH, W)
            val = jnp.sum(x1 * win, axis=0)   # (TH, W), f32 accumulation over CC
            k = i * D + j
            if single_chunk:
                out_ref[k, :, :] = (val * inv_c).astype(out_ref.dtype)
            else:
                acc_ref[k, :, :] = acc_ref[k, :, :] + val

    if not single_chunk:
        @pl.when(pl.program_id(2) == pl.num_programs(2) - 1)
        def _finalize():
            out_ref[...] = (acc_ref[...] * inv_c).astype(out_ref.dtype)


def _vmem_capacity_bytes():
    """Per-core VMEM capacity (generation aware), with a conservative fallback."""
    try:
        cap = getattr(pltpu.get_tpu_info(), "vmem_capacity_bytes", None)
        if cap:
            return int(cap)
    except Exception:
        pass
    return 64 * 2 ** 20          # v7x per-TensorCore capacity (safe lower bound)


def _step_vmem_bytes(TH, CC, Hp, Wp, Ws, D, isz):
    """Resident bytes for one pipelined grid step: double-buffered blocks,
    accumulator scratch, and the kernel's f32 temporaries."""
    x1_blk = 2 * CC * TH * Ws * isz
    x2_blk = 2 * CC * Hp * Wp * isz
    out_blk = 2 * D * D * TH * Ws * isz
    acc = D * D * TH * Ws * 4
    temps = 2 * CC * (TH + D - 1) * Wp * 4 + 3 * CC * TH * Ws * 4
    return x1_blk + x2_blk + out_blk + acc + temps


def _choose_tile_h(Hs_pad, min_tiles, fits):
    """Largest multiple-of-8 tile dividing Hs_pad that fits the VMEM budget and
    (if possible) exposes at least `min_tiles` grid steps along H."""
    cands = [t for t in range(Hs_pad, 0, -8) if Hs_pad % t == 0]
    for th in cands:
        if Hs_pad // th >= min_tiles and fits(th):
            return th
    for th in cands:
        if fits(th):
            return th
    return cands[-1]


def correlation(x1, x2, *, max_displacement=1, stride2=1):
    """Pallas TPU implementation of Correlation.forward (kernel_size=1)."""
    B, C, H, W = x1.shape
    md = max_displacement
    D = 2 * md // stride2 + 1

    # Indexing-only glue matching the PyTorch module: stride2 subsampling of x1,
    # zero-pad + stride2 subsampling of x2.
    x1s = x1[:, :, ::stride2, ::stride2]
    x2p = jnp.pad(x2, ((0, 0), (0, 0), (md, md), (md, md)))
    x2s = x2p[:, :, ::stride2, ::stride2]

    Hs, Ws = x1s.shape[2], x1s.shape[3]
    Hp, Wp = x2s.shape[2], x2s.shape[3]
    # In-kernel windows read x2s[:, :, i:i+TH, j:j+Ws] with i, j < D; VMEM reads
    # are unchecked, so fail loudly if the padded extents are too small.
    assert Hp >= Hs + D - 1, (Hp, Hs, D)
    assert Wp >= Ws + D - 1, (Wp, Ws, D)

    # Keep H tiles sublane-aligned: pad Hs up to a multiple of 8 (zero x1 rows
    # produce zero cost rows which are sliced off below).
    Hs_pad = -(-Hs // 8) * 8
    if Hs_pad != Hs:
        x1s = jnp.pad(x1s, ((0, 0), (0, 0), (0, Hs_pad - Hs), (0, 0)))
        x2s = jnp.pad(x2s, ((0, 0), (0, 0), (0, Hs_pad - Hs), (0, 0)))
        Hp += Hs_pad - Hs

    isz = jnp.dtype(x1.dtype).itemsize
    vmem_cap = _vmem_capacity_bytes()
    budget = int(0.7 * vmem_cap)

    # Channel chunk: largest divisor of C (capped at 32) whose double-buffered
    # x2 chunk uses at most a quarter of the budget, leaving room for large TH.
    CC = 1
    for d in range(min(C, 32), 0, -1):
        if C % d == 0 and 2 * d * Hp * Wp * isz <= budget // 4:
            CC = d
            break
    num_chunks = C // CC

    fits = lambda th: _step_vmem_bytes(th, CC, Hp, Wp, Ws, D, isz) <= budget
    min_tiles = 2 if (B == 1 and Hs_pad >= 16) else 1   # keep both TCs busy for B=1
    TH = _choose_tile_h(Hs_pad, min_tiles, fits)

    est = _step_vmem_bytes(TH, CC, Hp, Wp, Ws, D, isz)
    vmem_limit = int(min(vmem_cap * 9 // 10, max(2 * est, 32 * 2 ** 20)))
    vmem_limit = max(vmem_limit, est + (4 << 20))        # never clamp below estimate

    grid = (B, Hs_pad // TH, num_chunks)

    cost = pl.CostEstimate(
        flops=2 * B * C * D * D * Hs_pad * Ws,
        transcendentals=0,
        bytes_accessed=int(isz * (B * C * Hs_pad * Ws
                                  + (Hs_pad // TH) * B * C * Hp * Wp
                                  + B * D * D * Hs_pad * Ws)),
    )

    kernel = functools.partial(
        _correlation_kernel,
        D=D, TH=TH, inv_c=float(1.0 / C), single_chunk=(num_chunks == 1),
    )

    out = pl.pallas_call(
        kernel,
        out_shape=jax.ShapeDtypeStruct((B, D * D, Hs_pad, Ws), x1.dtype),
        grid=grid,
        in_specs=[
            pl.BlockSpec((None, CC, TH, Ws), lambda b, h, c: (b, c, h, 0)),
            pl.BlockSpec((None, CC, Hp, Wp), lambda b, h, c: (b, c, 0, 0)),
        ],
        out_specs=pl.BlockSpec((None, D * D, TH, Ws), lambda b, h, c: (b, 0, h, 0)),
        scratch_shapes=[pltpu.VMEM((D * D, TH, Ws), jnp.float32)],
        compiler_params=pltpu.CompilerParams(
            dimension_semantics=("parallel", "parallel", "arbitrary"),
            vmem_limit_bytes=vmem_limit,
        ),
        cost_estimate=cost,
    )(x1s, x2s)

    if Hs_pad != Hs:
        out = out[:, :, :Hs, :]
    return out


if __name__ == "__main__":
    key = jax.random.PRNGKey(0)
    k1, k2 = jax.random.split(key)
    B, C, H, W = 2, 4, 16, 16
    x1 = jax.random.normal(k1, (B, C, H, W), dtype=jnp.float32)
    x2 = jax.random.normal(k2, (B, C, H, W), dtype=jnp.float32)

    out = jax.block_until_ready(correlation(x1, x2))

    # Pure-JAX reference of the PyTorch forward (default args).
    md, D = 1, 3
    x2p = jnp.pad(x2, ((0, 0), (0, 0), (md, md), (md, md)))
    ref = jnp.concatenate(
        [jnp.mean(x1 * x2p[:, :, i:i + H, j:j + W], axis=1, keepdims=True)
         for i in range(D) for j in range(D)],
        axis=1,
    )

    assert out.shape == (B, D * D, H, W), out.shape
    assert jnp.allclose(out, ref, atol=1e-5, rtol=1e-5)
    print("KERNEL_OK")
</pallas_src>

<mosaic_0001>
module attributes {stable_mosaic.version = 11 : i64} {
  func.func @_correlation_kernel(%arg0: i32, %arg1: i32, %arg2: i32, %arg3: memref<1x4x16x16xf32, #tpu.memory_space<vmem>>, %arg4: memref<1x4x18x18xf32, #tpu.memory_space<vmem>>, %arg5: memref<1x9x16x16xf32, #tpu.memory_space<vmem>>, %arg6: memref<9x16x16xf32, #tpu.memory_space<vmem>>) attributes {dimension_semantics = [#tpu.dimension_semantics<parallel>, #tpu.dimension_semantics<parallel>, #tpu.dimension_semantics<arbitrary>], iteration_bounds = array<i64: 2, 1, 1>, scalar_prefetch = 0 : i64, scratch_operands = 1 : i64, tpu.core_type = #tpu.core_type<tc>, window_params = [{transform_indices = @transform_0, window_bounds = array<i64: 1, 4, 16, 16>}, {transform_indices = @transform_1, window_bounds = array<i64: 1, 4, 18, 18>}, {transform_indices = @transform_2, window_bounds = array<i64: 1, 9, 16, 16>}]} {
    %c16_i32 = arith.constant 16 : i32
    %0 = arith.muli %arg1, %c16_i32 : i32
    %1 = tpu.assume_multiple %0, 16 : i32
    %c0 = arith.constant 0 : index
    %c0_0 = arith.constant 0 : index
    %c0_1 = arith.constant 0 : index
    %c0_2 = arith.constant 0 : index
    %2 = vector.load %arg3[%c0, %c0_0, %c0_1, %c0_2] : memref<1x4x16x16xf32, #tpu.memory_space<vmem>>, vector<1x4x16x16xf32>
    %3 = vector.shape_cast %2 : vector<1x4x16x16xf32> to vector<4x16x16xf32>
    %c0_3 = arith.constant 0 : index
    %c0_4 = arith.constant 0 : index
    %4 = arith.index_cast %1 : i32 to index
    %c0_5 = arith.constant 0 : index
    %5 = vector.load %arg4[%c0_3, %c0_4, %4, %c0_5] : memref<1x4x18x18xf32, #tpu.memory_space<vmem>>, vector<1x4x18x18xf32>
    %6 = vector.shape_cast %5 : vector<1x4x18x18xf32> to vector<4x18x18xf32>
    %7 = vector.extract_strided_slice %6 {offsets = [0, 0, 0], sizes = [4, 18, 16], strides = [1, 1, 1]} : vector<4x18x18xf32> to vector<4x18x16xf32>
    %8 = vector.extract_strided_slice %7 {offsets = [0, 0, 0], sizes = [4, 16, 16], strides = [1, 1, 1]} : vector<4x18x16xf32> to vector<4x16x16xf32>
    %9 = arith.mulf %3, %8 : vector<4x16x16xf32>
    %cst = arith.constant dense<0.000000e+00> : vector<16x16xf32>
    %10 = vector.multi_reduction <add>, %9, %cst [0] : vector<4x16x16xf32> to vector<16x16xf32>
    %cst_6 = arith.constant 2.500000e-01 : f32
    %11 = vector.broadcast %cst_6 : f32 to vector<16x16xf32>
    %12 = arith.mulf %10, %11 : vector<16x16xf32>
    %c0_7 = arith.constant 0 : index
    %c0_8 = arith.constant 0 : index
    %c0_9 = arith.constant 0 : index
    %c0_10 = arith.constant 0 : index
    %13 = vector.load %arg5[%c0_7, %c0_8, %c0_9, %c0_10] : memref<1x9x16x16xf32, #tpu.memory_space<vmem>>, vector<1x1x16x16xf32>
    %14 = vector.shape_cast %13 : vector<1x1x16x16xf32> to vector<16x16xf32>
    %15 = vector.shape_cast %12 : vector<16x16xf32> to vector<1x1x16x16xf32>
    tpu.vector_store %arg5[%c0_7, %c0_8, %c0_9, %c0_10], %15 {strides = array<i32>} : memref<1x9x16x16xf32, #tpu.memory_space<vmem>>, vector<1x1x16x16xf32>,
    %16 = vector.extract_strided_slice %7 {offsets = [0, 1, 0], sizes = [4, 16, 16], strides = [1, 1, 1]} : vector<4x18x16xf32> to vector<4x16x16xf32>
    %17 = arith.mulf %3, %16 : vector<4x16x16xf32>
    %cst_11 = arith.constant dense<0.000000e+00> : vector<16x16xf32>
    %18 = vector.multi_reduction <add>, %17, %cst_11 [0] : vector<4x16x16xf32> to vector<16x16xf32>
    %cst_12 = arith.constant 2.500000e-01 : f32
    %19 = vector.broadcast %cst_12 : f32 to vector<16x16xf32>
    %20 = arith.mulf %18, %19 : vector<16x16xf32>
    %c0_13 = arith.constant 0 : index
    %c3 = arith.constant 3 : index
    %c0_14 = arith.constant 0 : index
    %c0_15 = arith.constant 0 : index
    %21 = vector.load %arg5[%c0_13, %c3, %c0_14, %c0_15] : memref<1x9x16x16xf32, #tpu.memory_space<vmem>>, vector<1x1x16x16xf32>
    %22 = vector.shape_cast %21 : vector<1x1x16x16xf32> to vector<16x16xf32>
    %23 = vector.shape_cast %20 : vector<16x16xf32> to vector<1x1x16x16xf32>
    tpu.vector_store %arg5[%c0_13, %c3, %c0_14, %c0_15], %23 {strides = array<i32>} : memref<1x9x16x16xf32, #tpu.memory_space<vmem>>, vector<1x1x16x16xf32>,
    %24 = vector.extract_strided_slice %7 {offsets = [0, 2, 0], sizes = [4, 16, 16], strides = [1, 1, 1]} : vector<4x18x16xf32> to vector<4x16x16xf32>
    %25 = arith.mulf %3, %24 : vector<4x16x16xf32>
    %cst_16 = arith.constant dense<0.000000e+00> : vector<16x16xf32>
    %26 = vector.multi_reduction <add>, %25, %cst_16 [0] : vector<4x16x16xf32> to vector<16x16xf32>
    %cst_17 = arith.constant 2.500000e-01 : f32
    %27 = vector.broadcast %cst_17 : f32 to vector<16x16xf32>
    %28 = arith.mulf %26, %27 : vector<16x16xf32>
    %c0_18 = arith.constant 0 : index
    %c6 = arith.constant 6 : index
    %c0_19 = arith.constant 0 : index
    %c0_20 = arith.constant 0 : index
    %29 = vector.load %arg5[%c0_18, %c6, %c0_19, %c0_20] : memref<1x9x16x16xf32, #tpu.memory_space<vmem>>, vector<1x1x16x16xf32>
    %30 = vector.shape_cast %29 : vector<1x1x16x16xf32> to vector<16x16xf32>
    %31 = vector.shape_cast %28 : vector<16x16xf32> to vector<1x1x16x16xf32>
    tpu.vector_store %arg5[%c0_18, %c6, %c0_19, %c0_20], %31 {strides = array<i32>} : memref<1x9x16x16xf32, #tpu.memory_space<vmem>>, vector<1x1x16x16xf32>,
    %32 = vector.extract_strided_slice %6 {offsets = [0, 0, 1], sizes = [4, 18, 16], strides = [1, 1, 1]} : vector<4x18x18xf32> to vector<4x18x16xf32>
    %33 = vector.extract_strided_slice %32 {offsets = [0, 0, 0], sizes = [4, 16, 16], strides = [1, 1, 1]} : vector<4x18x16xf32> to vector<4x16x16xf32>
    %34 = arith.mulf %3, %33 : vector<4x16x16xf32>
    %cst_21 = arith.constant dense<0.000000e+00> : vector<16x16xf32>
    %35 = vector.multi_reduction <add>, %34, %cst_21 [0] : vector<4x16x16xf32> to vector<16x16xf32>
    %cst_22 = arith.constant 2.500000e-01 : f32
    %36 = vector.broadcast %cst_22 : f32 to vector<16x16xf32>
    %37 = arith.mulf %35, %36 : vector<16x16xf32>
    %c0_23 = arith.constant 0 : index
    %c1 = arith.constant 1 : index
    %c0_24 = arith.constant 0 : index
    %c0_25 = arith.constant 0 : index
    %38 = vector.load %arg5[%c0_23, %c1, %c0_24, %c0_25] : memref<1x9x16x16xf32, #tpu.memory_space<vmem>>, vector<1x1x16x16xf32>
    %39 = vector.shape_cast %38 : vector<1x1x16x16xf32> to vector<16x16xf32>
    %40 = vector.shape_cast %37 : vector<16x16xf32> to vector<1x1x16x16xf32>
    tpu.vector_store %arg5[%c0_23, %c1, %c0_24, %c0_25], %40 {strides = array<i32>} : memref<1x9x16x16xf32, #tpu.memory_space<vmem>>, vector<1x1x16x16xf32>,
    %41 = vector.extract_strided_slice %32 {offsets = [0, 1, 0], sizes = [4, 16, 16], strides = [1, 1, 1]} : vector<4x18x16xf32> to vector<4x16x16xf32>
    %42 = arith.mulf %3, %41 : vector<4x16x16xf32>
    %cst_26 = arith.constant dense<0.000000e+00> : vector<16x16xf32>
    %43 = vector.multi_reduction <add>, %42, %cst_26 [0] : vector<4x16x16xf32> to vector<16x16xf32>
    %cst_27 = arith.constant 2.500000e-01 : f32
    %44 = vector.broadcast %cst_27 : f32 to vector<16x16xf32>
    %45 = arith.mulf %43, %44 : vector<16x16xf32>
    %c0_28 = arith.constant 0 : index
    %c4 = arith.constant 4 : index
    %c0_29 = arith.constant 0 : index
    %c0_30 = arith.constant 0 : index
    %46 = vector.load %arg5[%c0_28, %c4, %c0_29, %c0_30] : memref<1x9x16x16xf32, #tpu.memory_space<vmem>>, vector<1x1x16x16xf32>
    %47 = vector.shape_cast %46 : vector<1x1x16x16xf32> to vector<16x16xf32>
    %48 = vector.shape_cast %45 : vector<16x16xf32> to vector<1x1x16x16xf32>
    tpu.vector_store %arg5[%c0_28, %c4, %c0_29, %c0_30], %48 {strides = array<i32>} : memref<1x9x16x16xf32, #tpu.memory_space<vmem>>, vector<1x1x16x16xf32>,
    %49 = vector.extract_strided_slice %32 {offsets = [0, 2, 0], sizes = [4, 16, 16], strides = [1, 1, 1]} : vector<4x18x16xf32> to vector<4x16x16xf32>
    %50 = arith.mulf %3, %49 : vector<4x16x16xf32>
    %cst_31 = arith.constant dense<0.000000e+00> : vector<16x16xf32>
    %51 = vector.multi_reduction <add>, %50, %cst_31 [0] : vector<4x16x16xf32> to vector<16x16xf32>
    %cst_32 = arith.constant 2.500000e-01 : f32
    %52 = vector.broadcast %cst_32 : f32 to vector<16x16xf32>
    %53 = arith.mulf %51, %52 : vector<16x16xf32>
    %c0_33 = arith.constant 0 : index
    %c7 = arith.constant 7 : index
    %c0_34 = arith.constant 0 : index
    %c0_35 = arith.constant 0 : index
    %54 = vector.load %arg5[%c0_33, %c7, %c0_34, %c0_35] : memref<1x9x16x16xf32, #tpu.memory_space<vmem>>, vector<1x1x16x16xf32>
    %55 = vector.shape_cast %54 : vector<1x1x16x16xf32> to vector<16x16xf32>
    %56 = vector.shape_cast %53 : vector<16x16xf32> to vector<1x1x16x16xf32>
    tpu.vector_store %arg5[%c0_33, %c7, %c0_34, %c0_35], %56 {strides = array<i32>} : memref<1x9x16x16xf32, #tpu.memory_space<vmem>>, vector<1x1x16x16xf32>,
    %57 = vector.extract_strided_slice %6 {offsets = [0, 0, 2], sizes = [4, 18, 16], strides = [1, 1, 1]} : vector<4x18x18xf32> to vector<4x18x16xf32>
    %58 = vector.extract_strided_slice %57 {offsets = [0, 0, 0], sizes = [4, 16, 16], strides = [1, 1, 1]} : vector<4x18x16xf32> to vector<4x16x16xf32>
    %59 = arith.mulf %3, %58 : vector<4x16x16xf32>
    %cst_36 = arith.constant dense<0.000000e+00> : vector<16x16xf32>
    %60 = vector.multi_reduction <add>, %59, %cst_36 [0] : vector<4x16x16xf32> to vector<16x16xf32>
    %cst_37 = arith.constant 2.500000e-01 : f32
    %61 = vector.broadcast %cst_37 : f32 to vector<16x16xf32>
    %62 = arith.mulf %60, %61 : vector<16x16xf32>
    %c0_38 = arith.constant 0 : index
    %c2 = arith.constant 2 : index
    %c0_39 = arith.constant 0 : index
    %c0_40 = arith.constant 0 : index
    %63 = vector.load %arg5[%c0_38, %c2, %c0_39, %c0_40] : memref<1x9x16x16xf32, #tpu.memory_space<vmem>>, vector<1x1x16x16xf32>
    %64 = vector.shape_cast %63 : vector<1x1x16x16xf32> to vector<16x16xf32>
    %65 = vector.shape_cast %62 : vector<16x16xf32> to vector<1x1x16x16xf32>
    tpu.vector_store %arg5[%c0_38, %c2, %c0_39, %c0_40], %65 {strides = array<i32>} : memref<1x9x16x16xf32, #tpu.memory_space<vmem>>, vector<1x1x16x16xf32>,
    %66 = vector.extract_strided_slice %57 {offsets = [0, 1, 0], sizes = [4, 16, 16], strides = [1, 1, 1]} : vector<4x18x16xf32> to vector<4x16x16xf32>
    %67 = arith.mulf %3, %66 : vector<4x16x16xf32>
    %cst_41 = arith.constant dense<0.000000e+00> : vector<16x16xf32>
    %68 = vector.multi_reduction <add>, %67, %cst_41 [0] : vector<4x16x16xf32> to vector<16x16xf32>
    %cst_42 = arith.constant 2.500000e-01 : f32
    %69 = vector.broadcast %cst_42 : f32 to vector<16x16xf32>
    %70 = arith.mulf %68, %69 : vector<16x16xf32>
    %c0_43 = arith.constant 0 : index
    %c5 = arith.constant 5 : index
    %c0_44 = arith.constant 0 : index
    %c0_45 = arith.constant 0 : index
    %71 = vector.load %arg5[%c0_43, %c5, %c0_44, %c0_45] : memref<1x9x16x16xf32, #tpu.memory_space<vmem>>, vector<1x1x16x16xf32>
    %72 = vector.shape_cast %71 : vector<1x1x16x16xf32> to vector<16x16xf32>
    %73 = vector.shape_cast %70 : vector<16x16xf32> to vector<1x1x16x16xf32>
    tpu.vector_store %arg5[%c0_43, %c5, %c0_44, %c0_45], %73 {strides = array<i32>} : memref<1x9x16x16xf32, #tpu.memory_space<vmem>>, vector<1x1x16x16xf32>,
    %74 = vector.extract_strided_slice %57 {offsets = [0, 2, 0], sizes = [4, 16, 16], strides = [1, 1, 1]} : vector<4x18x16xf32> to vector<4x16x16xf32>
    %75 = arith.mulf %3, %74 : vector<4x16x16xf32>
    %cst_46 = arith.constant dense<0.000000e+00> : vector<16x16xf32>
    %76 = vector.multi_reduction <add>, %75, %cst_46 [0] : vector<4x16x16xf32> to vector<16x16xf32>
    %cst_47 = arith.constant 2.500000e-01 : f32
    %77 = vector.broadcast %cst_47 : f32 to vector<16x16xf32>
    %78 = arith.mulf %76, %77 : vector<16x16xf32>
    %c0_48 = arith.constant 0 : index
    %c8 = arith.constant 8 : index
    %c0_49 = arith.constant 0 : index
    %c0_50 = arith.constant 0 : index
    %79 = vector.load %arg5[%c0_48, %c8, %c0_49, %c0_50] : memref<1x9x16x16xf32, #tpu.memory_space<vmem>>, vector<1x1x16x16xf32>
    %80 = vector.shape_cast %79 : vector<1x1x16x16xf32> to vector<16x16xf32>
    %81 = vector.shape_cast %78 : vector<16x16xf32> to vector<1x1x16x16xf32>
    tpu.vector_store %arg5[%c0_48, %c8, %c0_49, %c0_50], %81 {strides = array<i32>} : memref<1x9x16x16xf32, #tpu.memory_space<vmem>>, vector<1x1x16x16xf32>,
    return
  }
  func.func @transform_0(%arg0: i32, %arg1: i32, %arg2: i32) -> (i32, i32, i32, i32) {
    %c0_i32 = arith.constant 0 : i32
    %c0_i32_0 = arith.constant 0 : i32
    return %arg0, %arg2, %arg1, %c0_i32 : i32, i32, i32, i32
  }
  func.func @transform_1(%arg0: i32, %arg1: i32, %arg2: i32) -> (i32, i32, i32, i32) {
    %c0_i32 = arith.constant 0 : i32
    %c0_i32_0 = arith.constant 0 : i32
    %c0_i32_1 = arith.constant 0 : i32
    return %arg0, %arg2, %c0_i32, %c0_i32_0 : i32, i32, i32, i32
  }
  func.func @transform_2(%arg0: i32, %arg1: i32, %arg2: i32) -> (i32, i32, i32, i32) {
    %c0_i32 = arith.constant 0 : i32
    %c0_i32_0 = arith.constant 0 : i32
    %c0_i32_1 = arith.constant 0 : i32
    return %arg0, %c0_i32, %arg1, %c0_i32_0 : i32, i32, i32, i32
  }
}

</mosaic_0001>

<llo_original>
// kernel: tpu_custom_call.1
$region0: #{tpu_custom_call.1}
  #allocation0 [shape = 'u32[]', space=smem, size = 0x4, offset = 0x4, fixed_abs, tag = 'smem constant byte address 0x4 - core index']
  #allocation1 [shape = 'u32[72,128]{1,0:T(1,128)}', space=vmem, size = 0x9000, scoped, tag = 'internal scratch']
  #allocation2 [shape = 'f32[9,16,16]{2,1,0:T(8,128)}', space=vmem, size = 0x12000, scoped, tag = 'scratch operand']
  %s0 = inlined_call_operand.vmem [shape: f32[2,4,16,16], index: 0, kind: input, shape index: {}]
  %s1 = inlined_call_operand.vmem [shape: f32[2,4,18,18], index: 1, kind: input, shape index: {}]
  %s2 = inlined_call_operand.hbm [shape: f32[2,9,16,16], index: 2, kind: output, shape index: {}]
  %s3 = sld [smem:[#allocation0]]
  $region41: #{tpu_custom_call.1} parent=0
    _
  %s5 = ssub.s32 1, %s3
  %s6 = scalar_select 0, %s5, %s3
  $region1: #{tpu_custom_call.1} parent=0
    #allocation3 [shape = 'u8[147456]{0}', space=vmem, size = 0x24000, scoped, tag = 'output window, operand 0']
    #allocation4 [shape = 's32[2]{0}', space=sflag, size = 0x8, scoped, tag = 'scoped memory for tpu_custom_call.1']
    %7 = vsyncpa [#allocation4], 0
    %s8 = scalar_lea.sflag [#allocation4], 1
    %9 = vsyncpa %s8, 0
    loop: start=0, step=1, limit=4
    $region2: #{tpu_custom_call.1} parent=1 // loop_pre_header
      _
    $region3: #{tpu_custom_call.1} parent=1 // loop_header
      %s11 = sphi 0, %s15
      %p12 = scmp.ge.s32.totalorder %s11, 4
      %s18 = sphi 0, %s37
      %s19 = sphi 0, %s33
      %s20 = sphi 0, %s29
      %s21 = sphi 0, %s18
      %s22 = sphi 0, %s19
      %s23 = sphi 0, %s20
      %s24 = sphi 0, %s21
      %s25 = sphi 0, %s22
      %s26 = sphi 0, %s23
      %s44 = sphi 0, %s46
      %s47 = sphi 0, %s44
      %s48 = sphi 0, %s47
      %s64 = sphi 0, %s48
      %s72 = sphi 0, %s74
      %s75 = sphi 0, %s72
      %s76 = sphi 0, %s75
      %s92 = sphi 0, %s76
      %s100 = sphi 0, %s102
      %s103 = sphi 0, %s100
      %s104 = sphi 0, %s103
      %s120 = sphi 0, %s104
    $region4: #{tpu_custom_call.1} parent=1 // loop_header_branch
      %14 = sbr.rel (%p12) target = $region8
    $region5: #{tpu_custom_call.1} parent=1 // loop_body
      %s16 = ssub.s32 %s11, 1
      %s17 = ssub.s32 %s11, 2
      %s27 = sadd.s32 1, %s20
      %p28 = scmp.ge.s32.totalorder %s27, 1
      %s29 = scalar_select %p28, 0, %s27
      %s30 = sadd.s32 1, %s19
      %s31 = scalar_select %p28, %s30, %s19
      %p32 = scmp.ge.s32.totalorder %s31, 1
      %s33 = scalar_select %p32, 0, %s31
      %s34 = sadd.s32 1, %s18
      %s35 = scalar_select %p32, %s34, %s18
      %p36 = scmp.ge.s32.totalorder %s35, 2
      %s37 = scalar_select %p36, 0, %s35
      %s38 = ssub.s32 %s18, %s37
      %s39 = ssub.s32 %s20, %s29
      %s40 = sor.u32 %s38, %s39
      %s41 = ssub.s32 %s19, %s33
      %s42 = sor.u32 %s40, %s41
      %p43 = scmp.eq.s32.totalorder %s42, 0
      %s45 = sadd.s32 %s44, 1
      %s46 = scalar_select %p43, %s44, %s45
      %p49 = pneg %p43
      %p50 = scmp.eq.s32.totalorder %s11, 1
      %p51 = por %p49, %p50
      %p52 = scmp.ne.s32.totalorder %s44, %s47
      %p53 = scmp.eq.s32.totalorder %s11, 0
      %p54 = por %p52, %p53
      %p55 = scmp.ne.s32.totalorder %s44, %s47
      %p56 = scmp.eq.s32.totalorder %s16, 1
      %p57 = por %p55, %p56
      %p58 = scmp.ne.s32.totalorder %s47, %s48
      %p59 = scmp.eq.s32.totalorder %s16, 0
      %p60 = por %p58, %p59
      %p61 = scmp.ne.s32.totalorder %s47, %s48
      %p62 = scmp.eq.s32.totalorder %s17, 1
      %p63 = por %p61, %p62
      %p65 = scmp.ne.s32.totalorder %s48, %s64
      %p66 = scmp.eq.s32.totalorder %s17, 0
      %p67 = por %p65, %p66
      %s68 = ssub.s32 %s18, %s37
      %s69 = ssub.s32 %s20, %s29
      %s70 = sor.u32 %s68, %s69
      %p71 = scmp.eq.s32.totalorder %s70, 0
      %s73 = sadd.s32 %s72, 1
      %s74 = scalar_select %p71, %s72, %s73
      %p77 = pneg %p71
      %p78 = scmp.eq.s32.totalorder %s11, 1
      %p79 = por %p77, %p78
      %p80 = scmp.ne.s32.totalorder %s72, %s75
      %p81 = scmp.eq.s32.totalorder %s11, 0
      %p82 = por %p80, %p81
      %p83 = scmp.ne.s32.totalorder %s72, %s75
      %p84 = scmp.eq.s32.totalorder %s16, 1
      %p85 = por %p83, %p84
      %p86 = scmp.ne.s32.totalorder %s75, %s76
      %p87 = scmp.eq.s32.totalorder %s16, 0
      %p88 = por %p86, %p87
      %p89 = scmp.ne.s32.totalorder %s75, %s76
      %p90 = scmp.eq.s32.totalorder %s17, 1
      %p91 = por %p89, %p90
      %p93 = scmp.ne.s32.totalorder %s76, %s92
      %p94 = scmp.eq.s32.totalorder %s17, 0
      %p95 = por %p93, %p94
      %s96 = ssub.s32 %s18, %s37
      %s97 = ssub.s32 %s19, %s33
      %s98 = sor.u32 %s96, %s97
      %p99 = scmp.eq.s32.totalorder %s98, 0
      %s101 = sadd.s32 %s100, 1
      %s102 = scalar_select %p99, %s100, %s101
      %p105 = pneg %p99
      %p106 = scmp.eq.s32.totalorder %s11, 1
      %p107 = por %p105, %p106
      %p108 = scmp.ne.s32.totalorder %s100, %s103
      %p109 = scmp.eq.s32.totalorder %s11, 0
      %p110 = por %p108, %p109
      %p111 = scmp.ne.s32.totalorder %s100, %s103
      %p112 = scmp.eq.s32.totalorder %s16, 1
      %p113 = por %p111, %p112
      %p114 = scmp.ne.s32.totalorder %s103, %s104
      %p115 = scmp.eq.s32.totalorder %s16, 0
      %p116 = por %p114, %p115
      %p117 = scmp.ne.s32.totalorder %s103, %s104
      %p118 = scmp.eq.s32.totalorder %s17, 1
      %p119 = por %p117, %p118
      %p121 = scmp.ne.s32.totalorder %s104, %s120
      %p122 = scmp.eq.s32.totalorder %s17, 0
      %p123 = por %p121, %p122
      %p124 = scmp.le.s32.totalorder 1, %s11
      %p125 = scmp.lt.s32.totalorder %s11, 3
      %p126 = pnand %p124, %p125
      %p127 = pneg %p126
      // Predicated region
      $region9: #{tpu_custom_call.1} parent=5 // pred_check
        _
      $region10: #{tpu_custom_call.1} parent=5 // pred_check_branch
        %129 = sbr.rel (%p126) target = $region12
      $region11: #{tpu_custom_call.1} parent=5 // pred_region
        %s130 = ssub.s32 %s11, 1
      $region12: #{tpu_custom_call.1} parent=5 // pred_fallthru
        _
      %p131 = scmp.lt.s32.totalorder %s11, 2
      // Predicated region
      $region13: #{tpu_custom_call.1} parent=5 // pred_check
        %p132 = pneg %p131
      $region14: #{tpu_custom_call.1} parent=5 // pred_check_branch
        %134 = sbr.rel (%p132) target = $region16
      $region15: #{tpu_custom_call.1} parent=5 // pred_region
        // Predicated region
        $region17: #{tpu_custom_call.1} parent=15 // pred_check
          %p135 = pneg %p54
        $region18: #{tpu_custom_call.1} parent=15 // pred_check_branch
          %137 = sbr.rel (%p135) target = $region20
        $region19: #{tpu_custom_call.1} parent=15 // pred_region
          %s138 = smul.u32 4, %s20
          %s139 = smul.u32 2, %s19
          %p140 = scmp.lt.s32.totalorder %s18, 1
          %s141 = scalar_select %p140, %s18, 1
          %p142 = scmp.lt.s32.totalorder %s138, 3
          %s143 = scalar_select %p142, %s138, 3
          %p144 = scmp.lt.s32.totalorder %s139, 1
          %s145 = scalar_select %p144, %s139, 1
          %s146 = smul.addr %s143, 2
          %s147 = sadd.s32 %s145, %s146
          %s148 = smul.addr %s141, 8
          %s149 = sadd.s32 %s147, %s148
          %s150 = smul.addr %s149, 8
          %s151 = scalar_lea.vmem %s0, %s150
          %s152 = smul.u32 4, %s20
          %s153 = smul.u32 2, %s19
        $region20: #{tpu_custom_call.1} parent=15 // pred_fallthru
          _
        // Predicated region
        $region21: #{tpu_custom_call.1} parent=15 // pred_check
          %p154 = pneg %p82
        $region22: #{tpu_custom_call.1} parent=15 // pred_check_branch
          %156 = sbr.rel (%p154) target = $region24
        $region23: #{tpu_custom_call.1} parent=15 // pred_region
          %s157 = smul.u32 4, %s20
          %p158 = scmp.lt.s32.totalorder %s18, 1
          %s159 = scalar_select %p158, %s18, 1
          %p160 = scmp.lt.s32.totalorder %s157, 3
          %s161 = scalar_select %p160, %s157, 3
          %s162 = smul.addr %s161, 3
          %s163 = smul.addr %s159, 12
          %s164 = sadd.s32 %s162, %s163
          %s165 = smul.addr %s164, 8
          %s166 = scalar_lea.vmem %s1, %s165
          %s167 = smul.u32 4, %s20
        $region24: #{tpu_custom_call.1} parent=15 // pred_fallthru
          _
      $region16: #{tpu_custom_call.1} parent=5 // pred_fallthru
        _
      %p168 = scmp.le.s32.totalorder 1, %s11
      %p169 = scmp.lt.s32.totalorder %s11, 3
      %p170 = pnand %p168, %p169
      %p171 = pneg %p170
      // Predicated region
      $region25: #{tpu_custom_call.1} parent=5 // pred_check
        _
      $region26: #{tpu_custom_call.1} parent=5 // pred_check_branch
        %173 = sbr.rel (%p170) target = $region28
      $region27: #{tpu_custom_call.1} parent=5 // pred_region
        %s174 = ssub.s32 %s11, 1
        %s175 = smul.u32 4, %s23
        %s176 = smul.u32 2, %s22
        %p177 = scmp.lt.s32.totalorder %s21, 1
        %s178 = scalar_select %p177, %s21, 1
        %p179 = scmp.lt.s32.totalorder %s175, 3
        %s180 = scalar_select %p179, %s175, 3
        %p181 = scmp.lt.s32.totalorder %s176, 1
        %s182 = scalar_select %p181, %s176, 1
        %s183 = smul.addr %s180, 2
        %s184 = sadd.s32 %s182, %s183
        %s185 = smul.addr %s178, 8
        %s186 = sadd.s32 %s184, %s185
        %s187 = smul.addr %s186, 8
        %s188 = scalar_lea.vmem %s0, %s187
        %p189 = pneg %p60
        %p190 = pneg %p57
        %s191 = smul.u32 4, %s23
        %p192 = scmp.lt.s32.totalorder %s21, 1
        %s193 = scalar_select %p192, %s21, 1
        %p194 = scmp.lt.s32.totalorder %s191, 3
        %s195 = scalar_select %p194, %s191, 3
        %s196 = smul.addr %s195, 3
        %s197 = smul.addr %s193, 12
        %s198 = sadd.s32 %s196, %s197
        %s199 = smul.addr %s198, 8
        %s200 = scalar_lea.vmem %s1, %s199
        %p201 = pneg %p88
        %p202 = pneg %p85
        %p203 = pneg %p116
        %p204 = pneg %p113
        %s205 = sand.u32 %s103, 1
        %s206 = scalar_lea.sflag [#allocation4], %s205
        %s207 = sand.u32 %s103, 1
        %s208 = smul.addr %s207, 144
        %s209 = scalar_lea.vmem [#allocation3], %s208
        %s210 = smul.u32 4, %s23
        %s211 = smul.u32 2, %s22
        %p212 = scmp.lt.s32.totalorder %s21, 1
        %s213 = scalar_select %p212, %s21, 1
        %p214 = scmp.lt.s32.totalorder %s210, 3
        %s215 = scalar_select %p214, %s210, 3
        %p216 = scmp.lt.s32.totalorder %s211, 1
        %s217 = scalar_select %p216, %s211, 1
        %s218 = smul.addr %s215, 2
        %s219 = sadd.s32 %s217, %s218
        %s220 = smul.addr %s213, 8
        %s221 = sadd.s32 %s219, %s220
        %s222 = smul.addr %s221, 8
        %s223 = scalar_lea.vmem %s0, %s222
        %s224 = smul.u32 4, %s23
        %s225 = smul.u32 2, %s22
        %s226 = smul.u32 4, %s23
        %p227 = scmp.lt.s32.totalorder %s21, 1
        %s228 = scalar_select %p227, %s21, 1
        %p229 = scmp.lt.s32.totalorder %s226, 3
        %s230 = scalar_select %p229, %s226, 3
        %s231 = smul.addr %s230, 3
        %s232 = smul.addr %s228, 12
        %s233 = sadd.s32 %s231, %s232
        %s234 = smul.addr %s233, 8
        %s235 = scalar_lea.vmem %s1, %s234
        %s236 = smul.u32 4, %s23
        %s237 = smul.u32 2, %s22
        %s238 = smul.u32 %s22, 16
        %v239 = vld [vmem:[%s223] sm:$0xff]
        %v240 = vld [vmem:[%s223 + $0x8] sm:$0xff]
        %v241 = vld [vmem:[%s223 + $0x10] sm:$0xff]
        %v242 = vld [vmem:[%s223 + $0x18] sm:$0xff]
        %v243 = vld [vmem:[%s223 + $0x20] sm:$0xff]
        %v244 = vld [vmem:[%s223 + $0x28] sm:$0xff]
        %v245 = vld [vmem:[%s223 + $0x30] sm:$0xff]
        %v246 = vld [vmem:[%s223 + $0x38] sm:$0xff]
        %s247 = scalar_lea.vmem %s235, %s238
        %v248 = vld [vmem:[%s247] sm:$0xff]
        %v249 = vld [vmem:[%s247 + $0x8] sm:$0xff]
        %v250 = vld [vmem:[%s247 + $0x10] sm:$0x3]
        %v251 = vld [vmem:[%s247 + $0x18] sm:$0xff]
        %v252 = vld [vmem:[%s247 + $0x20] sm:$0xff]
        %v253 = vld [vmem:[%s247 + $0x28] sm:$0x3]
        %v254 = vld [vmem:[%s247 + $0x30] sm:$0xff]
        %v255 = vld [vmem:[%s247 + $0x38] sm:$0xff]
        %v256 = vld [vmem:[%s247 + $0x40] sm:$0x3]
        %v257 = vld [vmem:[%s247 + $0x48] sm:$0xff]
        %v258 = vld [vmem:[%s247 + $0x50] sm:$0xff]
        %v259 = vld [vmem:[%s247 + $0x58] sm:$0x3]
        %v260 = vmul.f32 %v239, %v248
        %v261 = vmul.f32 %v240, %v249
        %v262 = vmul.f32 %v241, %v251
        %v263 = vmul.f32 %v242, %v252
        %v264 = vmul.f32 %v243, %v254
        %v265 = vmul.f32 %v244, %v255
        %v266 = vmul.f32 %v245, %v257
        %v267 = vmul.f32 %v246, %v258
        %vm268 = vcmask 130048
        %v269 = vsel %vm268, %v260, 0.0
        %v270 = vsel %vm268, %v262, 0.0
        %v271 = vadd.f32 %v269, %v270
        %v272 = vsel %vm268, %v264, 0.0
        %v273 = vadd.f32 %v271, %v272
        %v274 = vsel %vm268, %v266, 0.0
        %v275 = vadd.f32 %v273, %v274
        %v276 = vsel %vm268, %v261, 0.0
        %v277 = vsel %vm268, %v263, 0.0
        %v278 = vadd.f32 %v276, %v277
        %v279 = vsel %vm268, %v265, 0.0
        %v280 = vadd.f32 %v278, %v279
        %v281 = vsel %vm268, %v267, 0.0
        %v282 = vadd.f32 %v280, %v281
        %v283 = vmul.f32 %v275, 0.25
        %v284 = vmul.f32 %v282, 0.25
        %285 = vst.msk [vmem:[%s209] sm:$0xff] %vm268, %v283
        %286 = vst.msk [vmem:[%s209 + $0x8] sm:$0xff] %vm268, %v284
        %vm299 = vcmask 1046528
        %v300 = vrot.slane %v248, 1
        %v301 = vrot.slane %v249, 1
        %v302 = vsel %vm299, %v300, %v301
        %v303 = vrot.slane %v250, 1
        %v304 = vsel %vm299, %v301, %v303
        %v305 = vrot.slane %v251, 1
        %v306 = vrot.slane %v252, 1
        %v307 = vsel %vm299, %v305, %v306
        %v308 = vrot.slane %v253, 1
        %v309 = vsel %vm299, %v306, %v308
        %v310 = vrot.slane %v254, 1
        %v311 = vrot.slane %v255, 1
        %v312 = vsel %vm299, %v310, %v311
        %v313 = vrot.slane %v256, 1
        %v314 = vsel %vm299, %v311, %v313
        %v315 = vrot.slane %v257, 1
        %v316 = vrot.slane %v258, 1
        %v317 = vsel %vm299, %v315, %v316
        %v318 = vrot.slane %v259, 1
        %v319 = vsel %vm299, %v316, %v318
        %v328 = vmul.f32 %v239, %v302
        %v329 = vmul.f32 %v240, %v304
        %v330 = vmul.f32 %v241, %v307
        %v331 = vmul.f32 %v242, %v309
        %v332 = vmul.f32 %v243, %v312
        %v333 = vmul.f32 %v244, %v314
        %v334 = vmul.f32 %v245, %v317
        %v335 = vmul.f32 %v246, %v319
        %v336 = vsel %vm268, %v328, 0.0
        %v337 = vsel %vm268, %v330, 0.0
        %v338 = vadd.f32 %v336, %v337
        %v339 = vsel %vm268, %v332, 0.0
        %v340 = vadd.f32 %v338, %v339
        %v341 = vsel %vm268, %v334, 0.0
        %v342 = vadd.f32 %v340, %v341
        %v343 = vsel %vm268, %v329, 0.0
        %v344 = vsel %vm268, %v331, 0.0
        %v345 = vadd.f32 %v343, %v344
        %v346 = vsel %vm268, %v333, 0.0
        %v347 = vadd.f32 %v345, %v346
        %v348 = vsel %vm268, %v335, 0.0
        %v349 = vadd.f32 %v347, %v348
        %v350 = vmul.f32 %v342, 0.25
        %v351 = vmul.f32 %v349, 0.25
        %s352 = scalar_lea.vmem %s209, 48 [#allocation3]
        %353 = vst.msk [vmem:[%s352] sm:$0xff] %vm268, %v350
        %354 = vst.msk [vmem:[%s352 + $0x8] sm:$0xff] %vm268, %v351
        %vm355 = vcmask 1045504
        %v356 = vrot.slane %v248, 2
        %v357 = vrot.slane %v249, 2
        %v358 = vsel %vm355, %v356, %v357
        %v359 = vrot.slane %v250, 2
        %v360 = vsel %vm355, %v357, %v359
        %v361 = vrot.slane %v251, 2
        %v362 = vrot.slane %v252, 2
        %v363 = vsel %vm355, %v361, %v362
        %v364 = vrot.slane %v253, 2
        %v365 = vsel %vm355, %v362, %v364
        %v366 = vrot.slane %v254, 2
        %v367 = vrot.slane %v255, 2
        %v368 = vsel %vm355, %v366, %v367
        %v369 = vrot.slane %v256, 2
        %v370 = vsel %vm355, %v367, %v369
        %v371 = vrot.slane %v257, 2
        %v372 = vrot.slane %v258, 2
        %v373 = vsel %vm355, %v371, %v372
        %v374 = vrot.slane %v259, 2
        %v375 = vsel %vm355, %v372, %v374
        %v384 = vmul.f32 %v239, %v358
        %v385 = vmul.f32 %v240, %v360
        %v386 = vmul.f32 %v241, %v363
        %v387 = vmul.f32 %v242, %v365
        %v388 = vmul.f32 %v243, %v368
        %v389 = vmul.f32 %v244, %v370
        %v390 = vmul.f32 %v245, %v373
        %v391 = vmul.f32 %v246, %v375
        %v392 = vsel %vm268, %v384, 0.0
        %v393 = vsel %vm268, %v386, 0.0
        %v394 = vadd.f32 %v392, %v393
        %v395 = vsel %vm268, %v388, 0.0
        %v396 = vadd.f32 %v394, %v395
        %v397 = vsel %vm268, %v390, 0.0
        %v398 = vadd.f32 %v396, %v397
        %v399 = vsel %vm268, %v385, 0.0
        %v400 = vsel %vm268, %v387, 0.0
        %v401 = vadd.f32 %v399, %v400
        %v402 = vsel %vm268, %v389, 0.0
        %v403 = vadd.f32 %v401, %v402
        %v404 = vsel %vm268, %v391, 0.0
        %v405 = vadd.f32 %v403, %v404
        %v406 = vmul.f32 %v398, 0.25
        %v407 = vmul.f32 %v405, 0.25
        %s408 = scalar_lea.vmem %s209, 96 [#allocation3]
        %409 = vst.msk [vmem:[%s408] sm:$0xff] %vm268, %v406
        %410 = vst.msk [vmem:[%s408 + $0x8] sm:$0xff] %vm268, %v407
        %411 = vrot.lane.b32.xlu0 %v248, 127
        %v412 = vpop.permute.xlu0 %411
        %413 = vrot.lane.b32.xlu0 %v249, 127
        %v414 = vpop.permute.xlu0 %413
        %415 = vrot.lane.b32.xlu0 %v251, 127
        %v416 = vpop.permute.xlu0 %415
        %417 = vrot.lane.b32.xlu0 %v252, 127
        %v418 = vpop.permute.xlu0 %417
        %419 = vrot.lane.b32.xlu0 %v254, 127
        %v420 = vpop.permute.xlu0 %419
        %421 = vrot.lane.b32.xlu0 %v255, 127
        %v422 = vpop.permute.xlu0 %421
        %423 = vrot.lane.b32.xlu0 %v257, 127
        %v424 = vpop.permute.xlu0 %423
        %425 = vrot.lane.b32.xlu0 %v258, 127
        %v426 = vpop.permute.xlu0 %425
        %v435 = vmul.f32 %v239, %v412
        %v436 = vmul.f32 %v240, %v414
        %v437 = vmul.f32 %v241, %v416
        %v438 = vmul.f32 %v242, %v418
        %v439 = vmul.f32 %v243, %v420
        %v440 = vmul.f32 %v244, %v422
        %v441 = vmul.f32 %v245, %v424
        %v442 = vmul.f32 %v246, %v426
        %v443 = vsel %vm268, %v435, 0.0
        %v444 = vsel %vm268, %v437, 0.0
        %v445 = vadd.f32 %v443, %v444
        %v446 = vsel %vm268, %v439, 0.0
        %v447 = vadd.f32 %v445, %v446
        %v448 = vsel %vm268, %v441, 0.0
        %v449 = vadd.f32 %v447, %v448
        %v450 = vsel %vm268, %v436, 0.0
        %v451 = vsel %vm268, %v438, 0.0
        %v452 = vadd.f32 %v450, %v451
        %v453 = vsel %vm268, %v440, 0.0
        %v454 = vadd.f32 %v452, %v453
        %v455 = vsel %vm268, %v442, 0.0
        %v456 = vadd.f32 %v454, %v455
        %v457 = vmul.f32 %v449, 0.25
        %v458 = vmul.f32 %v456, 0.25
        %s459 = scalar_lea.vmem %s209, 16 [#allocation3]
        %460 = vst.msk [vmem:[%s459] sm:$0xff] %vm268, %v457
        %461 = vst.msk [vmem:[%s459 + $0x8] sm:$0xff] %vm268, %v458
        %462 = vrot.lane.b32.xlu0 %v302, 127
        %v463 = vpop.permute.xlu0 %462
        %464 = vrot.lane.b32.xlu0 %v304, 127
        %v465 = vpop.permute.xlu0 %464
        %466 = vrot.lane.b32.xlu0 %v307, 127
        %v467 = vpop.permute.xlu0 %466
        %468 = vrot.lane.b32.xlu0 %v309, 127
        %v469 = vpop.permute.xlu0 %468
        %470 = vrot.lane.b32.xlu0 %v312, 127
        %v471 = vpop.permute.xlu0 %470
        %472 = vrot.lane.b32.xlu0 %v314, 127
        %v473 = vpop.permute.xlu0 %472
        %474 = vrot.lane.b32.xlu0 %v317, 127
        %v475 = vpop.permute.xlu0 %474
        %476 = vrot.lane.b32.xlu0 %v319, 127
        %v477 = vpop.permute.xlu0 %476
        %v486 = vmul.f32 %v239, %v463
        %v487 = vmul.f32 %v240, %v465
        %v488 = vmul.f32 %v241, %v467
        %v489 = vmul.f32 %v242, %v469
        %v490 = vmul.f32 %v243, %v471
        %v491 = vmul.f32 %v244, %v473
        %v492 = vmul.f32 %v245, %v475
        %v493 = vmul.f32 %v246, %v477
        %v494 = vsel %vm268, %v486, 0.0
        %v495 = vsel %vm268, %v488, 0.0
        %v496 = vadd.f32 %v494, %v495
        %v497 = vsel %vm268, %v490, 0.0
        %v498 = vadd.f32 %v496, %v497
        %v499 = vsel %vm268, %v492, 0.0
        %v500 = vadd.f32 %v498, %v499
        %v501 = vsel %vm268, %v487, 0.0
        %v502 = vsel %vm268, %v489, 0.0
        %v503 = vadd.f32 %v501, %v502
        %v504 = vsel %vm268, %v491, 0.0
        %v505 = vadd.f32 %v503, %v504
        %v506 = vsel %vm268, %v493, 0.0
        %v507 = vadd.f32 %v505, %v506
        %v508 = vmul.f32 %v500, 0.25
        %v509 = vmul.f32 %v507, 0.25
        %s510 = scalar_lea.vmem %s209, 64 [#allocation3]
        %511 = vst.msk [vmem:[%s510] sm:$0xff] %vm268, %v508
        %512 = vst.msk [vmem:[%s510 + $0x8] sm:$0xff] %vm268, %v509
        %513 = vrot.lane.b32.xlu0 %v358, 127
        %v514 = vpop.permute.xlu0 %513
        %515 = vrot.lane.b32.xlu0 %v360, 127
        %v516 = vpop.permute.xlu0 %515
        %517 = vrot.lane.b32.xlu0 %v363, 127
        %v518 = vpop.permute.xlu0 %517
        %519 = vrot.lane.b32.xlu0 %v365, 127
        %v520 = vpop.permute.xlu0 %519
        %521 = vrot.lane.b32.xlu0 %v368, 127
        %v522 = vpop.permute.xlu0 %521
        %523 = vrot.lane.b32.xlu0 %v370, 127
        %v524 = vpop.permute.xlu0 %523
        %525 = vrot.lane.b32.xlu0 %v373, 127
        %v526 = vpop.permute.xlu0 %525
        %527 = vrot.lane.b32.xlu0 %v375, 127
        %v528 = vpop.permute.xlu0 %527
        %v537 = vmul.f32 %v239, %v514
        %v538 = vmul.f32 %v240, %v516
        %v539 = vmul.f32 %v241, %v518
        %v540 = vmul.f32 %v242, %v520
        %v541 = vmul.f32 %v243, %v522
        %v542 = vmul.f32 %v244, %v524
        %v543 = vmul.f32 %v245, %v526
        %v544 = vmul.f32 %v246, %v528
        %v545 = vsel %vm268, %v537, 0.0
        %v546 = vsel %vm268, %v539, 0.0
        %v547 = vadd.f32 %v545, %v546
        %v548 = vsel %vm268, %v541, 0.0
        %v549 = vadd.f32 %v547, %v548
        %v550 = vsel %vm268, %v543, 0.0
        %v551 = vadd.f32 %v549, %v550
        %v552 = vsel %vm268, %v538, 0.0
        %v553 = vsel %vm268, %v540, 0.0
        %v554 = vadd.f32 %v552, %v553
        %v555 = vsel %vm268, %v542, 0.0
        %v556 = vadd.f32 %v554, %v555
        %v557 = vsel %vm268, %v544, 0.0
        %v558 = vadd.f32 %v556, %v557
        %v559 = vmul.f32 %v551, 0.25
        %v560 = vmul.f32 %v558, 0.25
        %s561 = scalar_lea.vmem %s209, 112 [#allocation3]
        %562 = vst.msk [vmem:[%s561] sm:$0xff] %vm268, %v559
        %563 = vst.msk [vmem:[%s561 + $0x8] sm:$0xff] %vm268, %v560
        %564 = vrot.lane.b32.xlu0 %v248, 126
        %v565 = vpop.permute.xlu0 %564
        %566 = vrot.lane.b32.xlu0 %v249, 126
        %v567 = vpop.permute.xlu0 %566
        %568 = vrot.lane.b32.xlu0 %v251, 126
        %v569 = vpop.permute.xlu0 %568
        %570 = vrot.lane.b32.xlu0 %v252, 126
        %v571 = vpop.permute.xlu0 %570
        %572 = vrot.lane.b32.xlu0 %v254, 126
        %v573 = vpop.permute.xlu0 %572
        %574 = vrot.lane.b32.xlu0 %v255, 126
        %v575 = vpop.permute.xlu0 %574
        %576 = vrot.lane.b32.xlu0 %v257, 126
        %v577 = vpop.permute.xlu0 %576
        %578 = vrot.lane.b32.xlu0 %v258, 126
        %v579 = vpop.permute.xlu0 %578
        %v588 = vmul.f32 %v239, %v565
        %v589 = vmul.f32 %v240, %v567
        %v590 = vmul.f32 %v241, %v569
        %v591 = vmul.f32 %v242, %v571
        %v592 = vmul.f32 %v243, %v573
        %v593 = vmul.f32 %v244, %v575
        %v594 = vmul.f32 %v245, %v577
        %v595 = vmul.f32 %v246, %v579
        %v596 = vsel %vm268, %v588, 0.0
        %v597 = vsel %vm268, %v590, 0.0
        %v598 = vadd.f32 %v596, %v597
        %v599 = vsel %vm268, %v592, 0.0
        %v600 = vadd.f32 %v598, %v599
        %v601 = vsel %vm268, %v594, 0.0
        %v602 = vadd.f32 %v600, %v601
        %v603 = vsel %vm268, %v589, 0.0
        %v604 = vsel %vm268, %v591, 0.0
        %v605 = vadd.f32 %v603, %v604
        %v606 = vsel %vm268, %v593, 0.0
        %v607 = vadd.f32 %v605, %v606
        %v608 = vsel %vm268, %v595, 0.0
        %v609 = vadd.f32 %v607, %v608
        %v610 = vmul.f32 %v602, 0.25
        %v611 = vmul.f32 %v609, 0.25
        %s612 = scalar_lea.vmem %s209, 32 [#allocation3]
        %613 = vst.msk [vmem:[%s612] sm:$0xff] %vm268, %v610
        %614 = vst.msk [vmem:[%s612 + $0x8] sm:$0xff] %vm268, %v611
        %615 = vrot.lane.b32.xlu0 %v302, 126
        %v616 = vpop.permute.xlu0 %615
        %617 = vrot.lane.b32.xlu0 %v304, 126
        %v618 = vpop.permute.xlu0 %617
        %619 = vrot.lane.b32.xlu0 %v307, 126
        %v620 = vpop.permute.xlu0 %619
        %621 = vrot.lane.b32.xlu0 %v309, 126
        %v622 = vpop.permute.xlu0 %621
        %623 = vrot.lane.b32.xlu0 %v312, 126
        %v624 = vpop.permute.xlu0 %623
        %625 = vrot.lane.b32.xlu0 %v314, 126
        %v626 = vpop.permute.xlu0 %625
        %627 = vrot.lane.b32.xlu0 %v317, 126
        %v628 = vpop.permute.xlu0 %627
        %629 = vrot.lane.b32.xlu0 %v319, 126
        %v630 = vpop.permute.xlu0 %629
        %v639 = vmul.f32 %v239, %v616
        %v640 = vmul.f32 %v240, %v618
        %v641 = vmul.f32 %v241, %v620
        %v642 = vmul.f32 %v242, %v622
        %v643 = vmul.f32 %v243, %v624
        %v644 = vmul.f32 %v244, %v626
        %v645 = vmul.f32 %v245, %v628
        %v646 = vmul.f32 %v246, %v630
        %v647 = vsel %vm268, %v639, 0.0
        %v648 = vsel %vm268, %v641, 0.0
        %v649 = vadd.f32 %v647, %v648
        %v650 = vsel %vm268, %v643, 0.0
        %v651 = vadd.f32 %v649, %v650
        %v652 = vsel %vm268, %v645, 0.0
        %v653 = vadd.f32 %v651, %v652
        %v654 = vsel %vm268, %v640, 0.0
        %v655 = vsel %vm268, %v642, 0.0
        %v656 = vadd.f32 %v654, %v655
        %v657 = vsel %vm268, %v644, 0.0
        %v658 = vadd.f32 %v656, %v657
        %v659 = vsel %vm268, %v646, 0.0
        %v660 = vadd.f32 %v658, %v659
        %v661 = vmul.f32 %v653, 0.25
        %v662 = vmul.f32 %v660, 0.25
        %s663 = scalar_lea.vmem %s209, 80 [#allocation3]
        %664 = vst.msk [vmem:[%s663] sm:$0xff] %vm268, %v661
        %665 = vst.msk [vmem:[%s663 + $0x8] sm:$0xff] %vm268, %v662
        %666 = vrot.lane.b32.xlu0 %v358, 126
        %v667 = vpop.permute.xlu0 %666
        %668 = vrot.lane.b32.xlu0 %v360, 126
        %v669 = vpop.permute.xlu0 %668
        %670 = vrot.lane.b32.xlu0 %v363, 126
        %v671 = vpop.permute.xlu0 %670
        %672 = vrot.lane.b32.xlu0 %v365, 126
        %v673 = vpop.permute.xlu0 %672
        %674 = vrot.lane.b32.xlu0 %v368, 126
        %v675 = vpop.permute.xlu0 %674
        %676 = vrot.lane.b32.xlu0 %v370, 126
        %v677 = vpop.permute.xlu0 %676
        %678 = vrot.lane.b32.xlu0 %v373, 126
        %v679 = vpop.permute.xlu0 %678
        %680 = vrot.lane.b32.xlu0 %v375, 126
        %v681 = vpop.permute.xlu0 %680
        %v690 = vmul.f32 %v239, %v667
        %v691 = vmul.f32 %v240, %v669
        %v692 = vmul.f32 %v241, %v671
        %v693 = vmul.f32 %v242, %v673
        %v694 = vmul.f32 %v243, %v675
        %v695 = vmul.f32 %v244, %v677
        %v696 = vmul.f32 %v245, %v679
        %v697 = vmul.f32 %v246, %v681
        %v698 = vsel %vm268, %v690, 0.0
        %v699 = vsel %vm268, %v692, 0.0
        %v700 = vadd.f32 %v698, %v699
        %v701 = vsel %vm268, %v694, 0.0
        %v702 = vadd.f32 %v700, %v701
        %v703 = vsel %vm268, %v696, 0.0
        %v704 = vadd.f32 %v702, %v703
        %v705 = vsel %vm268, %v691, 0.0
        %v706 = vsel %vm268, %v693, 0.0
        %v707 = vadd.f32 %v705, %v706
        %v708 = vsel %vm268, %v695, 0.0
        %v709 = vadd.f32 %v707, %v708
        %v710 = vsel %vm268, %v697, 0.0
        %v711 = vadd.f32 %v709, %v710
        %v712 = vmul.f32 %v704, 0.25
        %v713 = vmul.f32 %v711, 0.25
        %s714 = scalar_lea.vmem %s209, 128 [#allocation3]
        %715 = vst.msk [vmem:[%s714] sm:$0xff] %vm268, %v712
        %716 = vst.msk [vmem:[%s714 + $0x8] sm:$0xff] %vm268, %v713
        %s717 = sand.u32 %s103, 1
        %s718 = scalar_lea.sflag [#allocation4], %s717
        %s719 = sand.u32 %s103, 1
        %s720 = smul.addr %s719, 144
        %s721 = scalar_lea.vmem [#allocation3], %s720
        // Predicated region
        $region29: #{tpu_custom_call.1} parent=27 // pred_check
          %p722 = pneg %p113
        $region30: #{tpu_custom_call.1} parent=27 // pred_check_branch
          %724 = sbr.rel (%p722) target = $region32
        $region31: #{tpu_custom_call.1} parent=27 // pred_region
          %s725 = smul.u32 2, %s22
          %727 = vsyncadd %s718, 0
          %s728 = smul.addr %s21, 18
          %s729 = sadd.s32 %s725, %s728
          %s730 = smul.addr %s729, 8
          %s731 = scalar_lea.hbm %s2, %s730
          %s732 = sshll.u32 %s721, 4
          %s733 = int_to_ptr.vmem [resolvable:$true] %s732
          %s734 = sshll.u32 %s731, 4
          %s735 = int_to_ptr.hbm [resolvable:$true] %s734
          %740 = dma.vmem_to_hbm [thread:$0]  %s733, 2304, %s735, %s718, 128, 128, 8
        $region32: #{tpu_custom_call.1} parent=27 // pred_fallthru
          _
      $region28: #{tpu_custom_call.1} parent=5 // pred_fallthru
        _
      %p741 = scmp.le.s32.totalorder 2, %s11
      // Predicated region
      $region33: #{tpu_custom_call.1} parent=5 // pred_check
        %p742 = pneg %p741
      $region34: #{tpu_custom_call.1} parent=5 // pred_check_branch
        %744 = sbr.rel (%p742) target = $region36
      $region35: #{tpu_custom_call.1} parent=5 // pred_region
        %s745 = ssub.s32 %s11, 2
        // Predicated region
        $region37: #{tpu_custom_call.1} parent=35 // pred_check
          %p746 = pneg %p119
        $region38: #{tpu_custom_call.1} parent=35 // pred_check_branch
          %748 = sbr.rel (%p746) target = $region40
        $region39: #{tpu_custom_call.1} parent=35 // pred_region
          %s749 = sand.u32 %s104, 1
          %s750 = scalar_lea.sflag [#allocation4], %s749
          %s751 = sand.u32 %s104, 1
          %s752 = smul.addr %s751, 144
          %s753 = scalar_lea.vmem [#allocation3], %s752
          %755 = dma.done %s750, 2304
        $region40: #{tpu_custom_call.1} parent=35 // pred_fallthru
          _
      $region36: #{tpu_custom_call.1} parent=5 // pred_fallthru
        _
    $region6: #{tpu_custom_call.1} parent=1 // loop_footer
      %s15 = sadd.s32 1, %s11
    $region7: #{tpu_custom_call.1} parent=1 // loop_footer_branch
      %10 = sbr.rel target = $region3
    $region8: #{tpu_custom_call.1} parent=1 // loop_exit
      _
    %756 = vsyncpa [#allocation4], 1
    %s757 = scalar_lea.sflag [#allocation4], 1
    %758 = vsyncpa %s757, 1

</llo_original>
